<compile_context>
chip_gen: v7x
topology: tpu7x:2x2x1
jax: 0.10.0
libtpu: 0.0.40
codegen_flags: <defaults>
</compile_context>

<pallas_src>
import functools

import jax
import jax.numpy as jnp
from jax.experimental import pallas as pl
from jax.experimental.pallas import tpu as pltpu


def _round_up(x, m):
    return (x + m - 1) // m * m


# ---------------------------------------------------------------------------
# Kernel: 5 chained matmuls (BN already folded into weights).
# Activations [bb, feat] (batch on sublanes, features on lanes); weights are
# [in, out] so every layer is y = x @ W + b on the MXU with no transposes.
# Matmul operands bf16, f32 accumulation, f32 epilogue.
# ---------------------------------------------------------------------------
def _mlp_kernel(
    x_ref,
    w0_ref, b0_ref,
    w1_ref, b1_ref,
    w2_ref, b2_ref,
    w3_ref, b3_ref,
    w4_ref, b4_ref,
    out_ref,
):
    # text_proj (+ folded BN1) -> ReLU
    h = jnp.dot(x_ref[...], w0_ref[...], preferred_element_type=jnp.float32)
    h = jnp.maximum(h + b0_ref[...], 0.0)
    # Linear1 (+ folded BN2) -> ReLU
    h = jnp.dot(h.astype(jnp.bfloat16), w1_ref[...],
                preferred_element_type=jnp.float32)
    h = jnp.maximum(h + b1_ref[...], 0.0)
    # Linear2 (+ folded BN3) -> ReLU
    h = jnp.dot(h.astype(jnp.bfloat16), w2_ref[...],
                preferred_element_type=jnp.float32)
    h = jnp.maximum(h + b2_ref[...], 0.0)
    # Linear3 (+ folded BN4) -> ReLU
    h = jnp.dot(h.astype(jnp.bfloat16), w3_ref[...],
                preferred_element_type=jnp.float32)
    h = jnp.maximum(h + b3_ref[...], 0.0)
    # Final classifier Linear (no BN/ReLU); output lane-padded to 128 classes.
    out_ref[...] = (
        jnp.dot(h.astype(jnp.bfloat16), w4_ref[...],
                preferred_element_type=jnp.float32)
        + b4_ref[...]
    )


# ---------------------------------------------------------------------------
# One-time parameter preprocessing (call once at load time, not per forward).
# ---------------------------------------------------------------------------
def fold_params(params, eps=1e-5):
    """Fold eval-mode BN into the preceding Linear, lane-pad the final layer,
    cast weights to bf16. Returns (weights, biases, num_classes)."""
    (w0, b0, bn1, w1, b1, bn2, w2, b2, bn3, w3, b3, bn4, w4, b4) = params

    def fold(w, b, bn):
        gamma, beta, mean, var = bn
        s = gamma / jnp.sqrt(var + eps)
        c = beta - mean * s
        return w * s[None, :], b * s + c

    w0f, b0f = fold(w0, b0, bn1)
    w1f, b1f = fold(w1, b1, bn2)
    w2f, b2f = fold(w2, b2, bn3)
    w3f, b3f = fold(w3, b3, bn4)

    num_classes = int(w4.shape[1])
    nc_pad = _round_up(num_classes, 128)   # lane-dense output, no masked stores
    w4p = jnp.zeros((w4.shape[0], nc_pad), jnp.float32).at[:, :num_classes].set(w4)
    b4p = jnp.zeros((nc_pad,), jnp.float32).at[:num_classes].set(b4)

    weights = tuple(w.astype(jnp.bfloat16) for w in (w0f, w1f, w2f, w3f, w4p))
    biases = tuple(b.reshape(1, -1).astype(jnp.float32)
                   for b in (b0f, b1f, b2f, b3f, b4p))
    return weights, biases, num_classes


# ---------------------------------------------------------------------------
# Forward wrapper.
# ---------------------------------------------------------------------------
@functools.partial(jax.jit, static_argnames=("num_classes", "block_b"))
def standalone_classifier_forward(text_emb, weights, biases, num_classes,
                                  *, block_b=128):
    """Fused forward pass. text_emb: (B, text_dim) float32."""
    B, text_dim = text_emb.shape
    nc_pad = weights[4].shape[1]

    # Batch tile: multiple of 8 (sublanes), at most block_b. Pad the batch to
    # a multiple of the tile so no remainder rows are dropped.
    bb = _round_up(min(block_b, _round_up(B, 8)), 8)
    Bp = _round_up(B, bb)

    x = text_emb.astype(jnp.bfloat16)
    if Bp != B:
        x = jnp.pad(x, ((0, Bp - B), (0, 0)))

    grid = (Bp // bb,)

    def full(arr):
        # Whole-array block, same block every grid step (weights stay resident).
        # NOTE: could add pipeline_mode=pl.Buffered(1) to single-buffer these
        # if hidden_dim is scaled up toward v7x's 64 MiB VMEM; irrelevant here.
        return pl.BlockSpec(arr.shape, lambda i: (0, 0))

    in_specs = [pl.BlockSpec((bb, text_dim), lambda i: (i, 0))]
    args = [x]
    for w, b in zip(weights, biases):
        in_specs += [full(w), full(b)]
        args += [w, b]

    out_padded = pl.pallas_call(
        _mlp_kernel,
        out_shape=jax.ShapeDtypeStruct((Bp, nc_pad), jnp.float32),
        grid=grid,
        in_specs=in_specs,
        out_specs=pl.BlockSpec((bb, nc_pad), lambda i: (i, 0)),
        compiler_params=pltpu.CompilerParams(
            dimension_semantics=("parallel",)),
    )(*args)

    return out_padded[:B, :num_classes]


# ---------------------------------------------------------------------------
# Param init (PyTorch-compatible shapes) and references.
# ---------------------------------------------------------------------------
def init_params(key, text_dim, hidden_dim, num_classes):
    """Linear weights stored [in, out] (transpose of torch's [out, in]);
    BN params are (gamma, beta, running_mean, running_var)."""
    def linear(key, fan_in, fan_out):
        k_w, k_b = jax.random.split(key)
        bound = 1.0 / jnp.sqrt(fan_in)
        w = jax.random.uniform(k_w, (fan_in, fan_out), jnp.float32, -bound, bound)
        b = jax.random.uniform(k_b, (fan_out,), jnp.float32, -bound, bound)
        return w, b

    def bn(key, dim):
        k1, k2, k3, k4 = jax.random.split(key, 4)
        gamma = 1.0 + 0.1 * jax.random.normal(k1, (dim,), jnp.float32)
        beta = 0.1 * jax.random.normal(k2, (dim,), jnp.float32)
        mean = 0.1 * jax.random.normal(k3, (dim,), jnp.float32)
        var = 1.0 + 0.1 * jax.random.uniform(k4, (dim,), jnp.float32)
        return gamma, beta, mean, var

    h, h2 = hidden_dim, hidden_dim * 2
    keys = jax.random.split(key, 9)
    w0, b0 = linear(keys[0], text_dim, h)
    bn1 = bn(keys[1], h)
    w1, b1 = linear(keys[2], h, h2)
    bn2 = bn(keys[3], h2)
    w2, b2 = linear(keys[4], h2, h2)
    bn3 = bn(keys[5], h2)
    w3, b3 = linear(keys[6], h2, h)
    bn4 = bn(keys[7], h)
    w4, b4 = linear(keys[8], h, num_classes)
    return (w0, b0, bn1, w1, b1, bn2, w2, b2, bn3, w3, b3, bn4, w4, b4)


def reference_forward_f32(text_emb, params):
    """Pure-JAX eval-mode reference in full f32 (original module math)."""
    (w0, b0, bn1, w1, b1, bn2, w2, b2, bn3, w3, b3, bn4, w4, b4) = params
    eps = 1e-5

    def bn_relu(x, bn_p):
        gamma, beta, mean, var = bn_p
        return jnp.maximum((x - mean) / jnp.sqrt(var + eps) * gamma + beta, 0.0)

    t = text_emb @ w0 + b0
    t = bn_relu(t, bn1) @ w1 + b1
    t = bn_relu(t, bn2) @ w2 + b2
    t = bn_relu(t, bn3) @ w3 + b3
    t = bn_relu(t, bn4) @ w4 + b4
    return t


def reference_forward_matched(text_emb, weights, biases, num_classes):
    """Pure-JAX reference using the same folded/bf16-rounded operands."""
    h = text_emb.astype(jnp.bfloat16)
    n = len(weights)
    for i, (w, b) in enumerate(zip(weights, biases)):
        h = jnp.dot(h, w, preferred_element_type=jnp.float32) + b
        if i < n - 1:
            h = jnp.maximum(h, 0.0).astype(jnp.bfloat16)
    return h[:, :num_classes]


if __name__ == "__main__":
    # Small shapes consistent with the module's constructor signature.
    B, TEXT_DIM, HIDDEN_DIM, NUM_CLASSES = 8, 256, 128, 3

    key = jax.random.PRNGKey(0)
    k_params, k_x = jax.random.split(key)
    params = init_params(k_params, TEXT_DIM, HIDDEN_DIM, NUM_CLASSES)
    text_emb = jax.random.normal(k_x, (B, TEXT_DIM), jnp.float32)

    weights, biases, num_classes = fold_params(params)

    out = standalone_classifier_forward(text_emb, weights, biases, num_classes)
    out = jax.block_until_ready(out)
    assert out.shape == (B, NUM_CLASSES), out.shape

    # Exact-math check: same bf16 operand rounding as the kernel.
    ref_m = reference_forward_matched(text_emb, weights, biases, num_classes)
    assert jnp.allclose(out, ref_m, atol=1e-2, rtol=1e-2), "mismatch vs matched ref"

    # Semantic check vs full-f32 eval-mode module math (loose tolerance covers
    # bf16 operand rounding of weights/activations).
    ref_f32 = reference_forward_f32(text_emb, params)
    assert jnp.max(jnp.abs(out - ref_f32)) < 0.25, "mismatch vs f32 reference"

    # Odd batch size (not a multiple of the tile): verifies padding path.
    out_odd = standalone_classifier_forward(text_emb[:5], weights, biases,
                                            num_classes)
    out_odd = jax.block_until_ready(out_odd)
    assert out_odd.shape == (5, NUM_CLASSES)
    assert jnp.allclose(out_odd, ref_m[:5], atol=1e-2, rtol=1e-2)

    print("KERNEL_OK")
</pallas_src>

<mosaic_0001>
module attributes {stable_mosaic.version = 11 : i64} {
  func.func @_mlp_kernel(%arg0: i32, %arg1: memref<8x256xbf16, #tpu.memory_space<vmem>>, %arg2: memref<256x128xbf16, #tpu.memory_space<vmem>>, %arg3: memref<1x128xf32, #tpu.memory_space<vmem>>, %arg4: memref<128x256xbf16, #tpu.memory_space<vmem>>, %arg5: memref<1x256xf32, #tpu.memory_space<vmem>>, %arg6: memref<256x256xbf16, #tpu.memory_space<vmem>>, %arg7: memref<1x256xf32, #tpu.memory_space<vmem>>, %arg8: memref<256x128xbf16, #tpu.memory_space<vmem>>, %arg9: memref<1x128xf32, #tpu.memory_space<vmem>>, %arg10: memref<128x128xbf16, #tpu.memory_space<vmem>>, %arg11: memref<1x128xf32, #tpu.memory_space<vmem>>, %arg12: memref<8x128xf32, #tpu.memory_space<vmem>>) attributes {dimension_semantics = [#tpu.dimension_semantics<parallel>], iteration_bounds = array<i64: 1>, scalar_prefetch = 0 : i64, scratch_operands = 0 : i64, tpu.core_type = #tpu.core_type<tc>, window_params = [{transform_indices = @transform_0, window_bounds = array<i64: 8, 256>}, {pipeline_mode = #tpu.pipeline_mode<synchronous>, transform_indices = @transform_1, window_bounds = array<i64: 256, 128>}, {pipeline_mode = #tpu.pipeline_mode<synchronous>, transform_indices = @transform_2, window_bounds = array<i64: 1, 128>}, {pipeline_mode = #tpu.pipeline_mode<synchronous>, transform_indices = @transform_3, window_bounds = array<i64: 128, 256>}, {pipeline_mode = #tpu.pipeline_mode<synchronous>, transform_indices = @transform_4, window_bounds = array<i64: 1, 256>}, {pipeline_mode = #tpu.pipeline_mode<synchronous>, transform_indices = @transform_5, window_bounds = array<i64: 256, 256>}, {pipeline_mode = #tpu.pipeline_mode<synchronous>, transform_indices = @transform_6, window_bounds = array<i64: 1, 256>}, {pipeline_mode = #tpu.pipeline_mode<synchronous>, transform_indices = @transform_7, window_bounds = array<i64: 256, 128>}, {pipeline_mode = #tpu.pipeline_mode<synchronous>, transform_indices = @transform_8, window_bounds = array<i64: 1, 128>}, {pipeline_mode = #tpu.pipeline_mode<synchronous>, transform_indices = @transform_9, window_bounds = array<i64: 128, 128>}, {pipeline_mode = #tpu.pipeline_mode<synchronous>, transform_indices = @transform_10, window_bounds = array<i64: 1, 128>}, {transform_indices = @transform_11, window_bounds = array<i64: 8, 128>}]} {
    %c0 = arith.constant 0 : index
    %c0_0 = arith.constant 0 : index
    %0 = vector.load %arg1[%c0, %c0_0] : memref<8x256xbf16, #tpu.memory_space<vmem>>, vector<8x256xbf16>
    %c0_1 = arith.constant 0 : index
    %c0_2 = arith.constant 0 : index
    %1 = vector.load %arg2[%c0_1, %c0_2] : memref<256x128xbf16, #tpu.memory_space<vmem>>, vector<256x128xbf16>
    %cst = arith.constant dense<0.000000e+00> : vector<8x128xf32>
    %2 = tpu.matmul %0, %1, %cst {dimension_numbers = #tpu.dot_dimension_numbers<[1], [0], [0], [1], [0, 0, 1, 1], [], []>} : vector<8x256xbf16>, vector<256x128xbf16>, vector<8x128xf32> -> vector<8x128xf32>
    %c0_3 = arith.constant 0 : index
    %c0_4 = arith.constant 0 : index
    %3 = vector.load %arg3[%c0_3, %c0_4] : memref<1x128xf32, #tpu.memory_space<vmem>>, vector<1x128xf32>
    %4 = vector.broadcast %3 : vector<1x128xf32> to vector<8x128xf32>
    %5 = arith.addf %2, %4 : vector<8x128xf32>
    %cst_5 = arith.constant 0.000000e+00 : f32
    %6 = vector.broadcast %cst_5 : f32 to vector<8x128xf32>
    %7 = arith.maximumf %5, %6 : vector<8x128xf32>
    %8 = arith.truncf %7 : vector<8x128xf32> to vector<8x128xbf16>
    %c0_6 = arith.constant 0 : index
    %c0_7 = arith.constant 0 : index
    %9 = vector.load %arg4[%c0_6, %c0_7] : memref<128x256xbf16, #tpu.memory_space<vmem>>, vector<128x256xbf16>
    %cst_8 = arith.constant dense<0.000000e+00> : vector<8x256xf32>
    %10 = tpu.matmul %8, %9, %cst_8 {dimension_numbers = #tpu.dot_dimension_numbers<[1], [0], [0], [1], [0, 0, 1, 1], [], []>} : vector<8x128xbf16>, vector<128x256xbf16>, vector<8x256xf32> -> vector<8x256xf32>
    %c0_9 = arith.constant 0 : index
    %c0_10 = arith.constant 0 : index
    %11 = vector.load %arg5[%c0_9, %c0_10] : memref<1x256xf32, #tpu.memory_space<vmem>>, vector<1x256xf32>
    %12 = vector.broadcast %11 : vector<1x256xf32> to vector<8x256xf32>
    %13 = arith.addf %10, %12 : vector<8x256xf32>
    %cst_11 = arith.constant 0.000000e+00 : f32
    %14 = vector.broadcast %cst_11 : f32 to vector<8x256xf32>
    %15 = arith.maximumf %13, %14 : vector<8x256xf32>
    %16 = arith.truncf %15 : vector<8x256xf32> to vector<8x256xbf16>
    %c0_12 = arith.constant 0 : index
    %c0_13 = arith.constant 0 : index
    %17 = vector.load %arg6[%c0_12, %c0_13] : memref<256x256xbf16, #tpu.memory_space<vmem>>, vector<256x256xbf16>
    %cst_14 = arith.constant dense<0.000000e+00> : vector<8x256xf32>
    %18 = tpu.matmul %16, %17, %cst_14 {dimension_numbers = #tpu.dot_dimension_numbers<[1], [0], [0], [1], [0, 0, 1, 1], [], []>} : vector<8x256xbf16>, vector<256x256xbf16>, vector<8x256xf32> -> vector<8x256xf32>
    %c0_15 = arith.constant 0 : index
    %c0_16 = arith.constant 0 : index
    %19 = vector.load %arg7[%c0_15, %c0_16] : memref<1x256xf32, #tpu.memory_space<vmem>>, vector<1x256xf32>
    %20 = vector.broadcast %19 : vector<1x256xf32> to vector<8x256xf32>
    %21 = arith.addf %18, %20 : vector<8x256xf32>
    %cst_17 = arith.constant 0.000000e+00 : f32
    %22 = vector.broadcast %cst_17 : f32 to vector<8x256xf32>
    %23 = arith.maximumf %21, %22 : vector<8x256xf32>
    %24 = arith.truncf %23 : vector<8x256xf32> to vector<8x256xbf16>
    %c0_18 = arith.constant 0 : index
    %c0_19 = arith.constant 0 : index
    %25 = vector.load %arg8[%c0_18, %c0_19] : memref<256x128xbf16, #tpu.memory_space<vmem>>, vector<256x128xbf16>
    %cst_20 = arith.constant dense<0.000000e+00> : vector<8x128xf32>
    %26 = tpu.matmul %24, %25, %cst_20 {dimension_numbers = #tpu.dot_dimension_numbers<[1], [0], [0], [1], [0, 0, 1, 1], [], []>} : vector<8x256xbf16>, vector<256x128xbf16>, vector<8x128xf32> -> vector<8x128xf32>
    %c0_21 = arith.constant 0 : index
    %c0_22 = arith.constant 0 : index
    %27 = vector.load %arg9[%c0_21, %c0_22] : memref<1x128xf32, #tpu.memory_space<vmem>>, vector<1x128xf32>
    %28 = vector.broadcast %27 : vector<1x128xf32> to vector<8x128xf32>
    %29 = arith.addf %26, %28 : vector<8x128xf32>
    %cst_23 = arith.constant 0.000000e+00 : f32
    %30 = vector.broadcast %cst_23 : f32 to vector<8x128xf32>
    %31 = arith.maximumf %29, %30 : vector<8x128xf32>
    %32 = arith.truncf %31 : vector<8x128xf32> to vector<8x128xbf16>
    %c0_24 = arith.constant 0 : index
    %c0_25 = arith.constant 0 : index
    %33 = vector.load %arg10[%c0_24, %c0_25] : memref<128x128xbf16, #tpu.memory_space<vmem>>, vector<128x128xbf16>
    %cst_26 = arith.constant dense<0.000000e+00> : vector<8x128xf32>
    %34 = tpu.matmul %32, %33, %cst_26 {dimension_numbers = #tpu.dot_dimension_numbers<[1], [0], [0], [1], [0, 0, 1, 1], [], []>} : vector<8x128xbf16>, vector<128x128xbf16>, vector<8x128xf32> -> vector<8x128xf32>
    %c0_27 = arith.constant 0 : index
    %c0_28 = arith.constant 0 : index
    %35 = vector.load %arg11[%c0_27, %c0_28] : memref<1x128xf32, #tpu.memory_space<vmem>>, vector<1x128xf32>
    %36 = vector.broadcast %35 : vector<1x128xf32> to vector<8x128xf32>
    %37 = arith.addf %34, %36 : vector<8x128xf32>
    %c0_29 = arith.constant 0 : index
    %c0_30 = arith.constant 0 : index
    %38 = vector.load %arg12[%c0_29, %c0_30] : memref<8x128xf32, #tpu.memory_space<vmem>>, vector<8x128xf32>
    tpu.vector_store %arg12[%c0_29, %c0_30], %37 {strides = array<i32>} : memref<8x128xf32, #tpu.memory_space<vmem>>, vector<8x128xf32>,
    return
  }
  func.func @transform_0(%arg0: i32) -> (i32, i32) {
    %c0_i32 = arith.constant 0 : i32
    %c0_i32_0 = arith.constant 0 : i32
    return %arg0, %c0_i32 : i32, i32
  }
  func.func @transform_1(%arg0: i32) -> (i32, i32) {
    %c0_i32 = arith.constant 0 : i32
    %c0_i32_0 = arith.constant 0 : i32
    %c0_i32_1 = arith.constant 0 : i32
    return %c0_i32, %c0_i32_0 : i32, i32
  }
  func.func @transform_2(%arg0: i32) -> (i32, i32) {
    %c0_i32 = arith.constant 0 : i32
    %c0_i32_0 = arith.constant 0 : i32
    %c0_i32_1 = arith.constant 0 : i32
    return %c0_i32, %c0_i32_0 : i32, i32
  }
  func.func @transform_3(%arg0: i32) -> (i32, i32) {
    %c0_i32 = arith.constant 0 : i32
    %c0_i32_0 = arith.constant 0 : i32
    %c0_i32_1 = arith.constant 0 : i32
    return %c0_i32, %c0_i32_0 : i32, i32
  }
  func.func @transform_4(%arg0: i32) -> (i32, i32) {
    %c0_i32 = arith.constant 0 : i32
    %c0_i32_0 = arith.constant 0 : i32
    %c0_i32_1 = arith.constant 0 : i32
    return %c0_i32, %c0_i32_0 : i32, i32
  }
  func.func @transform_5(%arg0: i32) -> (i32, i32) {
    %c0_i32 = arith.constant 0 : i32
    %c0_i32_0 = arith.constant 0 : i32
    %c0_i32_1 = arith.constant 0 : i32
    return %c0_i32, %c0_i32_0 : i32, i32
  }
  func.func @transform_6(%arg0: i32) -> (i32, i32) {
    %c0_i32 = arith.constant 0 : i32
    %c0_i32_0 = arith.constant 0 : i32
    %c0_i32_1 = arith.constant 0 : i32
    return %c0_i32, %c0_i32_0 : i32, i32
  }
  func.func @transform_7(%arg0: i32) -> (i32, i32) {
    %c0_i32 = arith.constant 0 : i32
    %c0_i32_0 = arith.constant 0 : i32
    %c0_i32_1 = arith.constant 0 : i32
    return %c0_i32, %c0_i32_0 : i32, i32
  }
  func.func @transform_8(%arg0: i32) -> (i32, i32) {
    %c0_i32 = arith.constant 0 : i32
    %c0_i32_0 = arith.constant 0 : i32
    %c0_i32_1 = arith.constant 0 : i32
    return %c0_i32, %c0_i32_0 : i32, i32
  }
  func.func @transform_9(%arg0: i32) -> (i32, i32) {
    %c0_i32 = arith.constant 0 : i32
    %c0_i32_0 = arith.constant 0 : i32
    %c0_i32_1 = arith.constant 0 : i32
    return %c0_i32, %c0_i32_0 : i32, i32
  }
  func.func @transform_10(%arg0: i32) -> (i32, i32) {
    %c0_i32 = arith.constant 0 : i32
    %c0_i32_0 = arith.constant 0 : i32
    %c0_i32_1 = arith.constant 0 : i32
    return %c0_i32, %c0_i32_0 : i32, i32
  }
  func.func @transform_11(%arg0: i32) -> (i32, i32) {
    %c0_i32 = arith.constant 0 : i32
    %c0_i32_0 = arith.constant 0 : i32
    return %arg0, %c0_i32 : i32, i32
  }
}

</mosaic_0001>

<llo_original>
// kernel: standalone_classifier_forward.1
$region0: #{standalone_classifier_forward.1}
  #allocation0 [shape = 'u32[]', space=smem, size = 0x4, offset = 0x4, fixed_abs, tag = 'smem constant byte address 0x4 - core index']
  #allocation1 [shape = 'u32[144,128]{1,0:T(1,128)}', space=vmem, size = 0x12000, scoped, tag = 'internal scratch']
  %s0 = inlined_call_operand.vmem [shape: bf16[8,256], index: 0, kind: input, shape index: {}]
  %s1 = inlined_call_operand.hbm [shape: bf16[256,128], index: 1, kind: input, shape index: {}]
  %s2 = inlined_call_operand.vmem [shape: f32[1,128], index: 2, kind: input, shape index: {}]
  %s3 = inlined_call_operand.hbm [shape: bf16[128,256], index: 3, kind: input, shape index: {}]
  %s4 = inlined_call_operand.vmem [shape: f32[1,256], index: 4, kind: input, shape index: {}]
  %s5 = inlined_call_operand.hbm [shape: bf16[256,256], index: 5, kind: input, shape index: {}]
  %s6 = inlined_call_operand.vmem [shape: f32[1,256], index: 6, kind: input, shape index: {}]
  %s7 = inlined_call_operand.hbm [shape: bf16[256,128], index: 7, kind: input, shape index: {}]
  %s8 = inlined_call_operand.vmem [shape: f32[1,128], index: 8, kind: input, shape index: {}]
  %s9 = inlined_call_operand.hbm [shape: bf16[128,128], index: 9, kind: input, shape index: {}]
  %s10 = inlined_call_operand.vmem [shape: f32[1,128], index: 10, kind: input, shape index: {}]
  %s11 = inlined_call_operand.vmem [shape: f32[8,128], index: 11, kind: output, shape index: {}]
  %s12 = sld [smem:[#allocation0]]
  $region74: #{standalone_classifier_forward.1} parent=0
    _
  %s14 = ssub.s32 1, %s12
  %s15 = scalar_select 0, %s14, %s12
  $region1: #{standalone_classifier_forward.1} parent=0
    #allocation2 [shape = 'u8[65536]{0}', space=vmem, size = 0x10000, scoped, tag = 'input window, operand 1, single buffered']
    #allocation3 [shape = 's32[1]{0}', space=sflag, size = 0x4, scoped, tag = 'scoped memory for standalone_classifier_forward.1']
    #allocation4 [shape = 'u8[65536]{0}', space=vmem, size = 0x10000, scoped, tag = 'input window, operand 3, single buffered']
    #allocation5 [shape = 's32[1]{0}', space=sflag, size = 0x4, scoped, tag = 'scoped memory for standalone_classifier_forward.1']
    #allocation6 [shape = 'u8[131072]{0}', space=vmem, size = 0x20000, scoped, tag = 'input window, operand 5, single buffered']
    #allocation7 [shape = 'u8[65536]{0}', space=vmem, size = 0x10000, scoped, tag = 'input window, operand 7, single buffered']
    #allocation8 [shape = 's32[1]{0}', space=sflag, size = 0x4, scoped, tag = 'scoped memory for standalone_classifier_forward.1']
    #allocation9 [shape = 'u8[32768]{0}', space=vmem, size = 0x8000, scoped, tag = 'input window, operand 9, single buffered']
    %16 = vsyncpa [#allocation3], 0
    %17 = vsyncpa [#allocation5], 0
    %18 = vsyncpa [#allocation8], 0
    // Predicated region
    $region2: #{standalone_classifier_forward.1} parent=1 // pred_check
      _
    $region3: #{standalone_classifier_forward.1} parent=1 // pred_check_branch
      %20 = sbr.rel (0) target = $region5
    $region4: #{standalone_classifier_forward.1} parent=1 // pred_region
      _
    $region5: #{standalone_classifier_forward.1} parent=1 // pred_fallthru
      _
    // Predicated region
    $region6: #{standalone_classifier_forward.1} parent=1 // pred_check
      _
    $region7: #{standalone_classifier_forward.1} parent=1 // pred_check_branch
      %22 = sbr.rel (0) target = $region9
    $region8: #{standalone_classifier_forward.1} parent=1 // pred_region
      %s24 = ssub.s32 2048, 2048
      %25 = vsyncadd [#allocation3], %s24
      %s26 = sshll.u32 [#allocation2], 4
      %s27 = int_to_ptr.vmem [resolvable:$true] %s26
      %32 = dma.hbm_to_vmem [thread:$0]  %s1, 2048, %s27, [#allocation3], 64, 64, 4
    $region9: #{standalone_classifier_forward.1} parent=1 // pred_fallthru
      _
    // Predicated region
    $region10: #{standalone_classifier_forward.1} parent=1 // pred_check
      _
    $region11: #{standalone_classifier_forward.1} parent=1 // pred_check_branch
      %34 = sbr.rel (0) target = $region13
    $region12: #{standalone_classifier_forward.1} parent=1 // pred_region
      _
    $region13: #{standalone_classifier_forward.1} parent=1 // pred_fallthru
      _
    // Predicated region
    $region14: #{standalone_classifier_forward.1} parent=1 // pred_check
      _
    $region15: #{standalone_classifier_forward.1} parent=1 // pred_check_branch
      %36 = sbr.rel (0) target = $region17
    $region16: #{standalone_classifier_forward.1} parent=1 // pred_region
      %s38 = ssub.s32 2048, 2048
      %39 = vsyncadd [#allocation5], %s38
      %s40 = sshll.u32 [#allocation4], 4
      %s41 = int_to_ptr.vmem [resolvable:$true] %s40
      %46 = dma.hbm_to_vmem [thread:$0]  %s3, 2048, %s41, [#allocation5], 128, 128, 8
    $region17: #{standalone_classifier_forward.1} parent=1 // pred_fallthru
      _
    // Predicated region
    $region18: #{standalone_classifier_forward.1} parent=1 // pred_check
      _
    $region19: #{standalone_classifier_forward.1} parent=1 // pred_check_branch
      %48 = sbr.rel (0) target = $region21
    $region20: #{standalone_classifier_forward.1} parent=1 // pred_region
      _
    $region21: #{standalone_classifier_forward.1} parent=1 // pred_fallthru
      _
    // Predicated region
    $region22: #{standalone_classifier_forward.1} parent=1 // pred_check
      _
    $region23: #{standalone_classifier_forward.1} parent=1 // pred_check_branch
      %50 = sbr.rel (0) target = $region25
    $region24: #{standalone_classifier_forward.1} parent=1 // pred_region
      %s52 = ssub.s32 4096, 4096
      %53 = vsyncadd [#allocation5], %s52
      %s54 = sshll.u32 [#allocation6], 4
      %s55 = int_to_ptr.vmem [resolvable:$true] %s54
      %60 = dma.hbm_to_vmem [thread:$0]  %s5, 4096, %s55, [#allocation5], 128, 128, 8
    $region25: #{standalone_classifier_forward.1} parent=1 // pred_fallthru
      _
    // Predicated region
    $region26: #{standalone_classifier_forward.1} parent=1 // pred_check
      _
    $region27: #{standalone_classifier_forward.1} parent=1 // pred_check_branch
      %62 = sbr.rel (0) target = $region29
    $region28: #{standalone_classifier_forward.1} parent=1 // pred_region
      _
    $region29: #{standalone_classifier_forward.1} parent=1 // pred_fallthru
      _
    // Predicated region
    $region30: #{standalone_classifier_forward.1} parent=1 // pred_check
      _
    $region31: #{standalone_classifier_forward.1} parent=1 // pred_check_branch
      %64 = sbr.rel (0) target = $region33
    $region32: #{standalone_classifier_forward.1} parent=1 // pred_region
      %s66 = ssub.s32 2048, 2048
      %67 = vsyncadd [#allocation8], %s66
      %s68 = sshll.u32 [#allocation7], 4
      %s69 = int_to_ptr.vmem [resolvable:$true] %s68
      %74 = dma.hbm_to_vmem [thread:$0]  %s7, 2048, %s69, [#allocation8], 64, 64, 4
    $region33: #{standalone_classifier_forward.1} parent=1 // pred_fallthru
      _
    // Predicated region
    $region34: #{standalone_classifier_forward.1} parent=1 // pred_check
      _
    $region35: #{standalone_classifier_forward.1} parent=1 // pred_check_branch
      %76 = sbr.rel (0) target = $region37
    $region36: #{standalone_classifier_forward.1} parent=1 // pred_region
      _
    $region37: #{standalone_classifier_forward.1} parent=1 // pred_fallthru
      _
    // Predicated region
    $region38: #{standalone_classifier_forward.1} parent=1 // pred_check
      _
    $region39: #{standalone_classifier_forward.1} parent=1 // pred_check_branch
      %78 = sbr.rel (0) target = $region41
    $region40: #{standalone_classifier_forward.1} parent=1 // pred_region
      %s80 = ssub.s32 1024, 1024
      %81 = vsyncadd [#allocation8], %s80
      %s82 = sshll.u32 [#allocation9], 4
      %s83 = int_to_ptr.vmem [resolvable:$true] %s82
      %88 = dma.hbm_to_vmem [thread:$0]  %s9, 1024, %s83, [#allocation8], 64, 64, 4
    $region41: #{standalone_classifier_forward.1} parent=1 // pred_fallthru
      _
    // Predicated region
    $region42: #{standalone_classifier_forward.1} parent=1 // pred_check
      _
    $region43: #{standalone_classifier_forward.1} parent=1 // pred_check_branch
      %90 = sbr.rel (0) target = $region45
    $region44: #{standalone_classifier_forward.1} parent=1 // pred_region
      _
    $region45: #{standalone_classifier_forward.1} parent=1 // pred_fallthru
      _
    // Predicated region
    $region46: #{standalone_classifier_forward.1} parent=1 // pred_check
      _
    $region47: #{standalone_classifier_forward.1} parent=1 // pred_check_branch
      %92 = sbr.rel (0) target = $region49
    $region48: #{standalone_classifier_forward.1} parent=1 // pred_region
      %93 = dma.done [#allocation3], 2048
    $region49: #{standalone_classifier_forward.1} parent=1 // pred_fallthru
      _
    // Predicated region
    $region50: #{standalone_classifier_forward.1} parent=1 // pred_check
      _
    $region51: #{standalone_classifier_forward.1} parent=1 // pred_check_branch
      %95 = sbr.rel (0) target = $region53
    $region52: #{standalone_classifier_forward.1} parent=1 // pred_region
      %96 = dma.done [#allocation5], 2048
    $region53: #{standalone_classifier_forward.1} parent=1 // pred_fallthru
      _
    // Predicated region
    $region54: #{standalone_classifier_forward.1} parent=1 // pred_check
      _
    $region55: #{standalone_classifier_forward.1} parent=1 // pred_check_branch
      %98 = sbr.rel (0) target = $region57
    $region56: #{standalone_classifier_forward.1} parent=1 // pred_region
      %99 = dma.done [#allocation5], 4096
    $region57: #{standalone_classifier_forward.1} parent=1 // pred_fallthru
      _
    // Predicated region
    $region58: #{standalone_classifier_forward.1} parent=1 // pred_check
      _
    $region59: #{standalone_classifier_forward.1} parent=1 // pred_check_branch
      %101 = sbr.rel (0) target = $region61
    $region60: #{standalone_classifier_forward.1} parent=1 // pred_region
      %102 = dma.done [#allocation8], 2048
    $region61: #{standalone_classifier_forward.1} parent=1 // pred_fallthru
      _
    // Predicated region
    $region62: #{standalone_classifier_forward.1} parent=1 // pred_check
      _
    $region63: #{standalone_classifier_forward.1} parent=1 // pred_check_branch
      %104 = sbr.rel (0) target = $region65
    $region64: #{standalone_classifier_forward.1} parent=1 // pred_region
      %105 = dma.done [#allocation8], 1024
    $region65: #{standalone_classifier_forward.1} parent=1 // pred_fallthru
      _
    %v107 = vld [vmem:[%s0] sm:$0xff]
    %v108 = vld [vmem:[#allocation2] sm:$0xf]
    %v109 = vld [vmem:[#allocation2 + $0x4] sm:$0xf]
    %v110 = vld [vmem:[#allocation2 + $0x8] sm:$0xf]
    %v111 = vld [vmem:[#allocation2 + $0xc] sm:$0xf]
    %v112 = vld [vmem:[#allocation2 + $0x10] sm:$0xf]
    %v113 = vld [vmem:[#allocation2 + $0x14] sm:$0xf]
    %v114 = vld [vmem:[#allocation2 + $0x18] sm:$0xf]
    %v115 = vld [vmem:[#allocation2 + $0x1c] sm:$0xf]
    %v116 = vld [vmem:[#allocation2 + $0x20] sm:$0xf]
    %v117 = vld [vmem:[#allocation2 + $0x24] sm:$0xf]
    %v118 = vld [vmem:[#allocation2 + $0x28] sm:$0xf]
    %v119 = vld [vmem:[#allocation2 + $0x2c] sm:$0xf]
    %v120 = vld [vmem:[#allocation2 + $0x30] sm:$0xf]
    %v121 = vld [vmem:[#allocation2 + $0x34] sm:$0xf]
    %v122 = vld [vmem:[#allocation2 + $0x38] sm:$0xf]
    %v123 = vld [vmem:[#allocation2 + $0x3c] sm:$0xf]
    %v124 = vld [vmem:[#allocation2 + $0x40] sm:$0xf]
    %v125 = vld [vmem:[#allocation2 + $0x44] sm:$0xf]
    %v126 = vld [vmem:[#allocation2 + $0x48] sm:$0xf]
    %v127 = vld [vmem:[#allocation2 + $0x4c] sm:$0xf]
    %v128 = vld [vmem:[#allocation2 + $0x50] sm:$0xf]
    %v129 = vld [vmem:[#allocation2 + $0x54] sm:$0xf]
    %v130 = vld [vmem:[#allocation2 + $0x58] sm:$0xf]
    %v131 = vld [vmem:[#allocation2 + $0x5c] sm:$0xf]
    %v132 = vld [vmem:[#allocation2 + $0x60] sm:$0xf]
    %v133 = vld [vmem:[#allocation2 + $0x64] sm:$0xf]
    %v134 = vld [vmem:[#allocation2 + $0x68] sm:$0xf]
    %v135 = vld [vmem:[#allocation2 + $0x6c] sm:$0xf]
    %v136 = vld [vmem:[#allocation2 + $0x70] sm:$0xf]
    %v137 = vld [vmem:[#allocation2 + $0x74] sm:$0xf]
    %v138 = vld [vmem:[#allocation2 + $0x78] sm:$0xf]
    %v139 = vld [vmem:[#allocation2 + $0x7c] sm:$0xf]
    %v140 = vld [vmem:[%s2] sm:$0x1]
    %v142 = vlaneseq
    %v143 = vshrl.u32 %v142, 7
    %v144 = vsub.s32 0, %v143
    %v145 = vrot.slane %v140, %v144
    %v148 = vunpack.c.l.b16 %v107
    %v149 = vunpack.c.h.b16 %v107
    %v150 = vpack.c.b16 %v148, %v148
    %v151 = vpack.c.b16 %v149, %v149
    %v186 = vunpack.c.l.b16 %v108
    %v187 = vunpack.c.l.b16 %v109
    %v188 = vunpack.c.l.b16 %v110
    %v189 = vunpack.c.l.b16 %v111
    %v190 = vunpack.c.l.b16 %v112
    %v191 = vunpack.c.l.b16 %v113
    %v192 = vunpack.c.l.b16 %v114
    %v193 = vunpack.c.l.b16 %v115
    %v194 = vunpack.c.l.b16 %v116
    %v195 = vunpack.c.l.b16 %v117
    %v196 = vunpack.c.l.b16 %v118
    %v197 = vunpack.c.l.b16 %v119
    %v198 = vunpack.c.l.b16 %v120
    %v199 = vunpack.c.l.b16 %v121
    %v200 = vunpack.c.l.b16 %v122
    %v201 = vunpack.c.l.b16 %v123
    %v202 = vunpack.c.l.b16 %v124
    %v203 = vunpack.c.l.b16 %v125
    %v204 = vunpack.c.l.b16 %v126
    %v205 = vunpack.c.l.b16 %v127
    %v206 = vunpack.c.l.b16 %v128
    %v207 = vunpack.c.l.b16 %v129
    %v208 = vunpack.c.l.b16 %v130
    %v209 = vunpack.c.l.b16 %v131
    %v210 = vunpack.c.l.b16 %v132
    %v211 = vunpack.c.l.b16 %v133
    %v212 = vunpack.c.l.b16 %v134
    %v213 = vunpack.c.l.b16 %v135
    %v214 = vunpack.c.l.b16 %v136
    %v215 = vunpack.c.l.b16 %v137
    %v216 = vunpack.c.l.b16 %v138
    %v217 = vunpack.c.l.b16 %v139
    %v218 = vpack.c.b16 %v187, %v186
    %v219 = vpack.c.b16 %v189, %v188
    %v220 = vpack.c.b16 %v191, %v190
    %v221 = vpack.c.b16 %v193, %v192
    %v222 = vpack.c.b16 %v195, %v194
    %v223 = vpack.c.b16 %v197, %v196
    %v224 = vpack.c.b16 %v199, %v198
    %v225 = vpack.c.b16 %v201, %v200
    %v226 = vpack.c.b16 %v203, %v202
    %v227 = vpack.c.b16 %v205, %v204
    %v228 = vpack.c.b16 %v207, %v206
    %v229 = vpack.c.b16 %v209, %v208
    %v230 = vpack.c.b16 %v211, %v210
    %v231 = vpack.c.b16 %v213, %v212
    %v232 = vpack.c.b16 %v215, %v214
    %v233 = vpack.c.b16 %v217, %v216
    %250 = vmatprep.subr.bf16.mxu0 0
    %251 = vmatpush1.bf16.msra.mxu0 %v218
    %252 = vmatprep.subr.bf16.mxu0 0
    %253 = vmatpush1.bf16.msra.mxu0 %v219
    %254 = vmatprep.subr.bf16.mxu0 0
    %255 = vmatpush1.bf16.msra.mxu0 %v220
    %256 = vmatprep.subr.bf16.mxu0 0
    %257 = vmatpush1.bf16.msra.mxu0 %v221
    %258 = vmatprep.subr.bf16.mxu0 0
    %259 = vmatpush1.bf16.msra.mxu0 %v222
    %260 = vmatprep.subr.bf16.mxu0 0
    %261 = vmatpush1.bf16.msra.mxu0 %v223
    %262 = vmatprep.subr.bf16.mxu0 0
    %263 = vmatpush1.bf16.msra.mxu0 %v224
    %264 = vmatprep.subr.bf16.mxu0 0
    %265 = vmatpush1.bf16.msra.mxu0 %v225
    %266 = vmatprep.subr.bf16.mxu0 0
    %267 = vmatpush1.bf16.msra.mxu0 %v226
    %268 = vmatprep.subr.bf16.mxu0 0
    %269 = vmatpush1.bf16.msra.mxu0 %v227
    %270 = vmatprep.subr.bf16.mxu0 0
    %271 = vmatpush1.bf16.msra.mxu0 %v228
    %272 = vmatprep.subr.bf16.mxu0 0
    %273 = vmatpush1.bf16.msra.mxu0 %v229
    %274 = vmatprep.subr.bf16.mxu0 0
    %275 = vmatpush1.bf16.msra.mxu0 %v230
    %276 = vmatprep.subr.bf16.mxu0 0
    %277 = vmatpush1.bf16.msra.mxu0 %v231
    %278 = vmatprep.subr.bf16.mxu0 0
    %279 = vmatpush1.bf16.msra.mxu0 %v232
    %280 = vmatprep.subr.bf16.mxu0 0
    %281 = vmatpush1.bf16.msra.mxu0 %v233
    %282 = vmatprep.mubr.bf16.mxu0 %v151
    %283 = vmatmul.mubr.bf16.gmra.mrb[0].mxu0 %v150
    %v284 = vpop.f32.mrb[0].mxu0
    %v285 = vadd.f32 %v145, %v284
    %v286 = vpop.f32.mrb[0].mxu0
    %v287 = vpop.f32.mrb[0].mxu0
    %v288 = vpop.f32.mrb[0].mxu0
    %289 = vdwg.mxu0
    %v290 = vmax.f32 %v285, 0.0
    %v291 = vpack.c.bf16 %v290, %v290
    %v292 = vld [vmem:[#allocation4] sm:$0xff]
    %v293 = vld [vmem:[#allocation4 + $0x8] sm:$0xff]
    %v294 = vld [vmem:[#allocation4 + $0x10] sm:$0xff]
    %v295 = vld [vmem:[#allocation4 + $0x18] sm:$0xff]
    %v296 = vld [vmem:[#allocation4 + $0x20] sm:$0xff]
    %v297 = vld [vmem:[#allocation4 + $0x28] sm:$0xff]
    %v298 = vld [vmem:[#allocation4 + $0x30] sm:$0xff]
    %v299 = vld [vmem:[#allocation4 + $0x38] sm:$0xff]
    %v300 = vld [vmem:[#allocation4 + $0x40] sm:$0xff]
    %v301 = vld [vmem:[#allocation4 + $0x48] sm:$0xff]
    %v302 = vld [vmem:[#allocation4 + $0x50] sm:$0xff]
    %v303 = vld [vmem:[#allocation4 + $0x58] sm:$0xff]
    %v304 = vld [vmem:[#allocation4 + $0x60] sm:$0xff]
    %v305 = vld [vmem:[#allocation4 + $0x68] sm:$0xff]
    %v306 = vld [vmem:[#allocation4 + $0x70] sm:$0xff]
    %v307 = vld [vmem:[#allocation4 + $0x78] sm:$0xff]
    %v308 = vld [vmem:[%s4] sm:$0x3]
    %v310 = vlaneseq
    %v311 = vshrl.u32 %v310, 7
    %v312 = vsub.s32 0, %v311
    %v313 = vrot.slane %v308, %v312
    %v314 = vlaneseq
    %v315 = vshrl.u32 %v314, 7
    %v316 = vsub.s32 1, %v315
    %v317 = vrot.slane %v308, %v316
    %v336 = vunpack.c.l.b16 %v292
    %v337 = vunpack.c.h.b16 %v292
    %v338 = vunpack.c.l.b16 %v293
    %v339 = vunpack.c.h.b16 %v293
    %v340 = vunpack.c.l.b16 %v294
    %v341 = vunpack.c.h.b16 %v294
    %v342 = vunpack.c.l.b16 %v295
    %v343 = vunpack.c.h.b16 %v295
    %v344 = vunpack.c.l.b16 %v296
    %v345 = vunpack.c.h.b16 %v296
    %v346 = vunpack.c.l.b16 %v297
    %v347 = vunpack.c.h.b16 %v297
    %v348 = vunpack.c.l.b16 %v298
    %v349 = vunpack.c.h.b16 %v298
    %v350 = vunpack.c.l.b16 %v299
    %v351 = vunpack.c.h.b16 %v299
    %v352 = vunpack.c.l.b16 %v300
    %v353 = vunpack.c.h.b16 %v300
    %v354 = vunpack.c.l.b16 %v301
    %v355 = vunpack.c.h.b16 %v301
    %v356 = vunpack.c.l.b16 %v302
    %v357 = vunpack.c.h.b16 %v302
    %v358 = vunpack.c.l.b16 %v303
    %v359 = vunpack.c.h.b16 %v303
    %v360 = vunpack.c.l.b16 %v304
    %v361 = vunpack.c.h.b16 %v304
    %v362 = vunpack.c.l.b16 %v305
    %v363 = vunpack.c.h.b16 %v305
    %v364 = vunpack.c.l.b16 %v306
    %v365 = vunpack.c.h.b16 %v306
    %v366 = vunpack.c.l.b16 %v307
    %v367 = vunpack.c.h.b16 %v307
    %v368 = vpack.c.b16 %v338, %v336
    %v369 = vpack.c.b16 %v339, %v337
    %v370 = vpack.c.b16 %v342, %v340
    %v371 = vpack.c.b16 %v343, %v341
    %v372 = vpack.c.b16 %v346, %v344
    %v373 = vpack.c.b16 %v347, %v345
    %v374 = vpack.c.b16 %v350, %v348
    %v375 = vpack.c.b16 %v351, %v349
    %v376 = vpack.c.b16 %v354, %v352
    %v377 = vpack.c.b16 %v355, %v353
    %v378 = vpack.c.b16 %v358, %v356
    %v379 = vpack.c.b16 %v359, %v357
    %v380 = vpack.c.b16 %v362, %v360
    %v381 = vpack.c.b16 %v363, %v361
    %v382 = vpack.c.b16 %v366, %v364
    %v383 = vpack.c.b16 %v367, %v365
    %400 = vmatprep.subr.bf16.mxu0 %v369
    %401 = vmatpush1.bf16.msra.mxu0 %v368
    %402 = vmatprep.subr.bf16.mxu0 %v371
    %403 = vmatpush1.bf16.msra.mxu0 %v370
    %404 = vmatprep.subr.bf16.mxu0 %v373
    %405 = vmatpush1.bf16.msra.mxu0 %v372
    %406 = vmatprep.subr.bf16.mxu0 %v375
    %407 = vmatpush1.bf16.msra.mxu0 %v374
    %408 = vmatprep.subr.bf16.mxu0 %v377
    %409 = vmatpush1.bf16.msra.mxu0 %v376
    %410 = vmatprep.subr.bf16.mxu0 %v379
    %411 = vmatpush1.bf16.msra.mxu0 %v378
    %412 = vmatprep.subr.bf16.mxu0 %v381
    %413 = vmatpush1.bf16.msra.mxu0 %v380
    %414 = vmatprep.subr.bf16.mxu0 %v383
    %415 = vmatpush1.bf16.msra.mxu0 %v382
    %416 = vmatprep.subr.bf16.mxu0 0
    %417 = vmatpush1.bf16.msra.mxu0 0
    %418 = vmatprep.subr.bf16.mxu0 0
    %419 = vmatpush1.bf16.msra.mxu0 0
    %420 = vmatprep.subr.bf16.mxu0 0
    %421 = vmatpush1.bf16.msra.mxu0 0
    %422 = vmatprep.subr.bf16.mxu0 0
    %423 = vmatpush1.bf16.msra.mxu0 0
    %424 = vmatprep.subr.bf16.mxu0 0
    %425 = vmatpush1.bf16.msra.mxu0 0
    %426 = vmatprep.subr.bf16.mxu0 0
    %427 = vmatpush1.bf16.msra.mxu0 0
    %428 = vmatprep.subr.bf16.mxu0 0
    %429 = vmatpush1.bf16.msra.mxu0 0
    %430 = vmatprep.subr.bf16.mxu0 0
    %431 = vmatpush1.bf16.msra.mxu0 0
    %432 = vmatprep.mubr.bf16.mxu0 0
    %433 = vmatmul.mubr.bf16.gmra.mrb[0].mxu0 %v291
    %v434 = vpop.f32.mrb[0].mxu0
    %v435 = vadd.f32 %v313, %v434
    %v436 = vpop.f32.mrb[0].mxu0
    %v437 = vadd.f32 %v317, %v436
    %v438 = vpop.f32.mrb[0].mxu0
    %v439 = vpop.f32.mrb[0].mxu0
    %440 = vdwg.mxu0
    %v441 = vmax.f32 %v435, 0.0
    %v442 = vmax.f32 %v437, 0.0
    %v443 = vpack.c.bf16 %v441, %v441
    %v444 = vpack.c.bf16 %v442, %v442
    %v445 = vld [vmem:[#allocation6] sm:$0xff]
    %v446 = vld [vmem:[#allocation6 + $0x8] sm:$0xff]
    %v447 = vld [vmem:[#allocation6 + $0x10] sm:$0xff]
    %v448 = vld [vmem:[#allocation6 + $0x18] sm:$0xff]
    %v449 = vld [vmem:[#allocation6 + $0x20] sm:$0xff]
    %v450 = vld [vmem:[#allocation6 + $0x28] sm:$0xff]
    %v451 = vld [vmem:[#allocation6 + $0x30] sm:$0xff]
    %v452 = vld [vmem:[#allocation6 + $0x38] sm:$0xff]
    %v453 = vld [vmem:[#allocation6 + $0x40] sm:$0xff]
    %v454 = vld [vmem:[#allocation6 + $0x48] sm:$0xff]
    %v455 = vld [vmem:[#allocation6 + $0x50] sm:$0xff]
    %v456 = vld [vmem:[#allocation6 + $0x58] sm:$0xff]
    %v457 = vld [vmem:[#allocation6 + $0x60] sm:$0xff]
    %v458 = vld [vmem:[#allocation6 + $0x68] sm:$0xff]
    %v459 = vld [vmem:[#allocation6 + $0x70] sm:$0xff]
    %v460 = vld [vmem:[#allocation6 + $0x78] sm:$0xff]
    %v461 = vld [vmem:[#allocation6 + $0x80] sm:$0xff]
    %v462 = vld [vmem:[#allocation6 + $0x88] sm:$0xff]
    %v463 = vld [vmem:[#allocation6 + $0x90] sm:$0xff]
    %v464 = vld [vmem:[#allocation6 + $0x98] sm:$0xff]
    %v465 = vld [vmem:[#allocation6 + $0xa0] sm:$0xff]
    %v466 = vld [vmem:[#allocation6 + $0xa8] sm:$0xff]
    %v467 = vld [vmem:[#allocation6 + $0xb0] sm:$0xff]
    %v468 = vld [vmem:[#allocation6 + $0xb8] sm:$0xff]
    %v469 = vld [vmem:[#allocation6 + $0xc0] sm:$0xff]
    %v470 = vld [vmem:[#allocation6 + $0xc8] sm:$0xff]
    %v471 = vld [vmem:[#allocation6 + $0xd0] sm:$0xff]
    %v472 = vld [vmem:[#allocation6 + $0xd8] sm:$0xff]
    %v473 = vld [vmem:[#allocation6 + $0xe0] sm:$0xff]
    %v474 = vld [vmem:[#allocation6 + $0xe8] sm:$0xff]
    %v475 = vld [vmem:[#allocation6 + $0xf0] sm:$0xff]
    %v476 = vld [vmem:[#allocation6 + $0xf8] sm:$0xff]
    %v477 = vld [vmem:[%s6] sm:$0x3]
    %v479 = vlaneseq
    %v480 = vshrl.u32 %v479, 7
    %v481 = vsub.s32 0, %v480
    %v482 = vrot.slane %v477, %v481
    %v483 = vlaneseq
    %v484 = vshrl.u32 %v483, 7
    %v485 = vsub.s32 1, %v484
    %v486 = vrot.slane %v477, %v485
    %v521 = vunpack.c.l.b16 %v445
    %v522 = vunpack.c.h.b16 %v445
    %v523 = vunpack.c.l.b16 %v446
    %v524 = vunpack.c.h.b16 %v446
    %v525 = vunpack.c.l.b16 %v447
    %v526 = vunpack.c.h.b16 %v447
    %v527 = vunpack.c.l.b16 %v448
    %v528 = vunpack.c.h.b16 %v448
    %v529 = vunpack.c.l.b16 %v449
    %v530 = vunpack.c.h.b16 %v449
    %v531 = vunpack.c.l.b16 %v450
    %v532 = vunpack.c.h.b16 %v450
    %v533 = vunpack.c.l.b16 %v451
    %v534 = vunpack.c.h.b16 %v451
    %v535 = vunpack.c.l.b16 %v452
    %v536 = vunpack.c.h.b16 %v452
    %v537 = vunpack.c.l.b16 %v453
    %v538 = vunpack.c.h.b16 %v453
    %v539 = vunpack.c.l.b16 %v454
    %v540 = vunpack.c.h.b16 %v454
    %v541 = vunpack.c.l.b16 %v455
    %v542 = vunpack.c.h.b16 %v455
    %v543 = vunpack.c.l.b16 %v456
    %v544 = vunpack.c.h.b16 %v456
    %v545 = vunpack.c.l.b16 %v457
    %v546 = vunpack.c.h.b16 %v457
    %v547 = vunpack.c.l.b16 %v458
    %v548 = vunpack.c.h.b16 %v458
    %v549 = vunpack.c.l.b16 %v459
    %v550 = vunpack.c.h.b16 %v459
    %v551 = vunpack.c.l.b16 %v460
    %v552 = vunpack.c.h.b16 %v460
    %v553 = vunpack.c.l.b16 %v461
    %v554 = vunpack.c.h.b16 %v461
    %v555 = vunpack.c.l.b16 %v462
    %v556 = vunpack.c.h.b16 %v462
    %v557 = vunpack.c.l.b16 %v463
    %v558 = vunpack.c.h.b16 %v463
    %v559 = vunpack.c.l.b16 %v464
    %v560 = vunpack.c.h.b16 %v464
    %v561 = vunpack.c.l.b16 %v465
    %v562 = vunpack.c.h.b16 %v465
    %v563 = vunpack.c.l.b16 %v466
    %v564 = vunpack.c.h.b16 %v466
    %v565 = vunpack.c.l.b16 %v467
    %v566 = vunpack.c.h.b16 %v467
    %v567 = vunpack.c.l.b16 %v468
    %v568 = vunpack.c.h.b16 %v468
    %v569 = vunpack.c.l.b16 %v469
    %v570 = vunpack.c.h.b16 %v469
    %v571 = vunpack.c.l.b16 %v470
    %v572 = vunpack.c.h.b16 %v470
    %v573 = vunpack.c.l.b16 %v471
    %v574 = vunpack.c.h.b16 %v471
    %v575 = vunpack.c.l.b16 %v472
    %v576 = vunpack.c.h.b16 %v472
    %v577 = vunpack.c.l.b16 %v473
    %v578 = vunpack.c.h.b16 %v473
    %v579 = vunpack.c.l.b16 %v474
    %v580 = vunpack.c.h.b16 %v474
    %v581 = vunpack.c.l.b16 %v475
    %v582 = vunpack.c.h.b16 %v475
    %v583 = vunpack.c.l.b16 %v476
    %v584 = vunpack.c.h.b16 %v476
    %v585 = vpack.c.b16 %v523, %v521
    %v586 = vpack.c.b16 %v524, %v522
    %v587 = vpack.c.b16 %v527, %v525
    %v588 = vpack.c.b16 %v528, %v526
    %v589 = vpack.c.b16 %v531, %v529
    %v590 = vpack.c.b16 %v532, %v530
    %v591 = vpack.c.b16 %v535, %v533
    %v592 = vpack.c.b16 %v536, %v534
    %v593 = vpack.c.b16 %v539, %v537
    %v594 = vpack.c.b16 %v540, %v538
    %v595 = vpack.c.b16 %v543, %v541
    %v596 = vpack.c.b16 %v544, %v542
    %v597 = vpack.c.b16 %v547, %v545
    %v598 = vpack.c.b16 %v548, %v546
    %v599 = vpack.c.b16 %v551, %v549
    %v600 = vpack.c.b16 %v552, %v550
    %v601 = vpack.c.b16 %v555, %v553
    %v602 = vpack.c.b16 %v556, %v554
    %v603 = vpack.c.b16 %v559, %v557
    %v604 = vpack.c.b16 %v560, %v558
    %v605 = vpack.c.b16 %v563, %v561
    %v606 = vpack.c.b16 %v564, %v562
    %v607 = vpack.c.b16 %v567, %v565
    %v608 = vpack.c.b16 %v568, %v566
    %v609 = vpack.c.b16 %v571, %v569
    %v610 = vpack.c.b16 %v572, %v570
    %v611 = vpack.c.b16 %v575, %v573
    %v612 = vpack.c.b16 %v576, %v574
    %v613 = vpack.c.b16 %v579, %v577
    %v614 = vpack.c.b16 %v580, %v578
    %v615 = vpack.c.b16 %v583, %v581
    %v616 = vpack.c.b16 %v584, %v582
    %649 = vmatprep.subr.bf16.mxu0 %v586
    %650 = vmatpush1.bf16.msra.mxu0 %v585
    %651 = vmatprep.subr.bf16.mxu0 %v588
    %652 = vmatpush1.bf16.msra.mxu0 %v587
    %653 = vmatprep.subr.bf16.mxu0 %v590
    %654 = vmatpush1.bf16.msra.mxu0 %v589
    %655 = vmatprep.subr.bf16.mxu0 %v592
    %656 = vmatpush1.bf16.msra.mxu0 %v591
    %657 = vmatprep.subr.bf16.mxu0 %v594
    %658 = vmatpush1.bf16.msra.mxu0 %v593
    %659 = vmatprep.subr.bf16.mxu0 %v596
    %660 = vmatpush1.bf16.msra.mxu0 %v595
    %661 = vmatprep.subr.bf16.mxu0 %v598
    %662 = vmatpush1.bf16.msra.mxu0 %v597
    %663 = vmatprep.subr.bf16.mxu0 %v600
    %664 = vmatpush1.bf16.msra.mxu0 %v599
    %665 = vmatprep.subr.bf16.mxu0 %v602
    %666 = vmatpush1.bf16.msra.mxu0 %v601
    %667 = vmatprep.subr.bf16.mxu0 %v604
    %668 = vmatpush1.bf16.msra.mxu0 %v603
    %669 = vmatprep.subr.bf16.mxu0 %v606
    %670 = vmatpush1.bf16.msra.mxu0 %v605
    %671 = vmatprep.subr.bf16.mxu0 %v608
    %672 = vmatpush1.bf16.msra.mxu0 %v607
    %673 = vmatprep.subr.bf16.mxu0 %v610
    %674 = vmatpush1.bf16.msra.mxu0 %v609
    %675 = vmatprep.subr.bf16.mxu0 %v612
    %676 = vmatpush1.bf16.msra.mxu0 %v611
    %677 = vmatprep.subr.bf16.mxu0 %v614
    %678 = vmatpush1.bf16.msra.mxu0 %v613
    %679 = vmatprep.subr.bf16.mxu0 %v616
    %680 = vmatpush1.bf16.msra.mxu0 %v615
    %681 = vmatprep.mubr.bf16.mxu0 %v444
    %682 = vmatmul.mubr.bf16.gmra.mrb[0].mxu0 %v443
    %v683 = vpop.f32.mrb[0].mxu0
    %v684 = vadd.f32 %v482, %v683
    %v685 = vpop.f32.mrb[0].mxu0
    %v686 = vadd.f32 %v486, %v685
    %v687 = vpop.f32.mrb[0].mxu0
    %v688 = vpop.f32.mrb[0].mxu0
    %689 = vdwg.mxu0
    %v690 = vmax.f32 %v684, 0.0
    %v691 = vmax.f32 %v686, 0.0
    %v692 = vpack.c.bf16 %v690, %v690
    %v693 = vpack.c.bf16 %v691, %v691
    %v694 = vld [vmem:[#allocation7] sm:$0xf]
    %v695 = vld [vmem:[#allocation7 + $0x4] sm:$0xf]
    %v696 = vld [vmem:[#allocation7 + $0x8] sm:$0xf]
    %v697 = vld [vmem:[#allocation7 + $0xc] sm:$0xf]
    %v698 = vld [vmem:[#allocation7 + $0x10] sm:$0xf]
    %v699 = vld [vmem:[#allocation7 + $0x14] sm:$0xf]
    %v700 = vld [vmem:[#allocation7 + $0x18] sm:$0xf]
    %v701 = vld [vmem:[#allocation7 + $0x1c] sm:$0xf]
    %v702 = vld [vmem:[#allocation7 + $0x20] sm:$0xf]
    %v703 = vld [vmem:[#allocation7 + $0x24] sm:$0xf]
    %v704 = vld [vmem:[#allocation7 + $0x28] sm:$0xf]
    %v705 = vld [vmem:[#allocation7 + $0x2c] sm:$0xf]
    %v706 = vld [vmem:[#allocation7 + $0x30] sm:$0xf]
    %v707 = vld [vmem:[#allocation7 + $0x34] sm:$0xf]
    %v708 = vld [vmem:[#allocation7 + $0x38] sm:$0xf]
    %v709 = vld [vmem:[#allocation7 + $0x3c] sm:$0xf]
    %v710 = vld [vmem:[#allocation7 + $0x40] sm:$0xf]
    %v711 = vld [vmem:[#allocation7 + $0x44] sm:$0xf]
    %v712 = vld [vmem:[#allocation7 + $0x48] sm:$0xf]
    %v713 = vld [vmem:[#allocation7 + $0x4c] sm:$0xf]
    %v714 = vld [vmem:[#allocation7 + $0x50] sm:$0xf]
    %v715 = vld [vmem:[#allocation7 + $0x54] sm:$0xf]
    %v716 = vld [vmem:[#allocation7 + $0x58] sm:$0xf]
    %v717 = vld [vmem:[#allocation7 + $0x5c] sm:$0xf]
    %v718 = vld [vmem:[#allocation7 + $0x60] sm:$0xf]
    %v719 = vld [vmem:[#allocation7 + $0x64] sm:$0xf]
    %v720 = vld [vmem:[#allocation7 + $0x68] sm:$0xf]
    %v721 = vld [vmem:[#allocation7 + $0x6c] sm:$0xf]
    %v722 = vld [vmem:[#allocation7 + $0x70] sm:$0xf]
    %v723 = vld [vmem:[#allocation7 + $0x74] sm:$0xf]
    %v724 = vld [vmem:[#allocation7 + $0x78] sm:$0xf]
    %v725 = vld [vmem:[#allocation7 + $0x7c] sm:$0xf]
    %v726 = vld [vmem:[%s8] sm:$0x1]
    %v728 = vlaneseq
    %v729 = vshrl.u32 %v728, 7
    %v730 = vsub.s32 0, %v729
    %v731 = vrot.slane %v726, %v730
    %v765 = vunpack.c.l.b16 %v694
    %v766 = vunpack.c.l.b16 %v695
    %v767 = vunpack.c.l.b16 %v696
    %v768 = vunpack.c.l.b16 %v697
    %v769 = vunpack.c.l.b16 %v698
    %v770 = vunpack.c.l.b16 %v699
    %v771 = vunpack.c.l.b16 %v700
    %v772 = vunpack.c.l.b16 %v701
    %v773 = vunpack.c.l.b16 %v702
    %v774 = vunpack.c.l.b16 %v703
    %v775 = vunpack.c.l.b16 %v704
    %v776 = vunpack.c.l.b16 %v705
    %v777 = vunpack.c.l.b16 %v706
    %v778 = vunpack.c.l.b16 %v707
    %v779 = vunpack.c.l.b16 %v708
    %v780 = vunpack.c.l.b16 %v709
    %v781 = vunpack.c.l.b16 %v710
    %v782 = vunpack.c.l.b16 %v711
    %v783 = vunpack.c.l.b16 %v712
    %v784 = vunpack.c.l.b16 %v713
    %v785 = vunpack.c.l.b16 %v714
    %v786 = vunpack.c.l.b16 %v715
    %v787 = vunpack.c.l.b16 %v716
    %v788 = vunpack.c.l.b16 %v717
    %v789 = vunpack.c.l.b16 %v718
    %v790 = vunpack.c.l.b16 %v719
    %v791 = vunpack.c.l.b16 %v720
    %v792 = vunpack.c.l.b16 %v721
    %v793 = vunpack.c.l.b16 %v722
    %v794 = vunpack.c.l.b16 %v723
    %v795 = vunpack.c.l.b16 %v724
    %v796 = vunpack.c.l.b16 %v725
    %v797 = vpack.c.b16 %v766, %v765
    %v798 = vpack.c.b16 %v768, %v767
    %v799 = vpack.c.b16 %v770, %v769
    %v800 = vpack.c.b16 %v772, %v771
    %v801 = vpack.c.b16 %v774, %v773
    %v802 = vpack.c.b16 %v776, %v775
    %v803 = vpack.c.b16 %v778, %v777
    %v804 = vpack.c.b16 %v780, %v779
    %v805 = vpack.c.b16 %v782, %v781
    %v806 = vpack.c.b16 %v784, %v783
    %v807 = vpack.c.b16 %v786, %v785
    %v808 = vpack.c.b16 %v788, %v787
    %v809 = vpack.c.b16 %v790, %v789
    %v810 = vpack.c.b16 %v792, %v791
    %v811 = vpack.c.b16 %v794, %v793
    %v812 = vpack.c.b16 %v796, %v795
    %829 = vmatprep.subr.bf16.mxu0 0
    %830 = vmatpush1.bf16.msra.mxu0 %v797
    %831 = vmatprep.subr.bf16.mxu0 0
    %832 = vmatpush1.bf16.msra.mxu0 %v798
    %833 = vmatprep.subr.bf16.mxu0 0
    %834 = vmatpush1.bf16.msra.mxu0 %v799
    %835 = vmatprep.subr.bf16.mxu0 0
    %836 = vmatpush1.bf16.msra.mxu0 %v800
    %837 = vmatprep.subr.bf16.mxu0 0
    %838 = vmatpush1.bf16.msra.mxu0 %v801
    %839 = vmatprep.subr.bf16.mxu0 0
    %840 = vmatpush1.bf16.msra.mxu0 %v802
    %841 = vmatprep.subr.bf16.mxu0 0
    %842 = vmatpush1.bf16.msra.mxu0 %v803
    %843 = vmatprep.subr.bf16.mxu0 0
    %844 = vmatpush1.bf16.msra.mxu0 %v804
    %845 = vmatprep.subr.bf16.mxu0 0
    %846 = vmatpush1.bf16.msra.mxu0 %v805
    %847 = vmatprep.subr.bf16.mxu0 0
    %848 = vmatpush1.bf16.msra.mxu0 %v806
    %849 = vmatprep.subr.bf16.mxu0 0
    %850 = vmatpush1.bf16.msra.mxu0 %v807
    %851 = vmatprep.subr.bf16.mxu0 0
    %852 = vmatpush1.bf16.msra.mxu0 %v808
    %853 = vmatprep.subr.bf16.mxu0 0
    %854 = vmatpush1.bf16.msra.mxu0 %v809
    %855 = vmatprep.subr.bf16.mxu0 0
    %856 = vmatpush1.bf16.msra.mxu0 %v810
    %857 = vmatprep.subr.bf16.mxu0 0
    %858 = vmatpush1.bf16.msra.mxu0 %v811
    %859 = vmatprep.subr.bf16.mxu0 0
    %860 = vmatpush1.bf16.msra.mxu0 %v812
    %861 = vmatprep.mubr.bf16.mxu0 %v693
    %862 = vmatmul.mubr.bf16.gmra.mrb[0].mxu0 %v692
    %v863 = vpop.f32.mrb[0].mxu0
    %v864 = vadd.f32 %v731, %v863
    %v865 = vpop.f32.mrb[0].mxu0
    %v866 = vpop.f32.mrb[0].mxu0
    %v867 = vpop.f32.mrb[0].mxu0
    %868 = vdwg.mxu0
    %v869 = vmax.f32 %v864, 0.0
    %v870 = vpack.c.bf16 %v869, %v869
    %v871 = vld [vmem:[#allocation9] sm:$0xf]
    %v872 = vld [vmem:[#allocation9 + $0x4] sm:$0xf]
    %v873 = vld [vmem:[#allocation9 + $0x8] sm:$0xf]
    %v874 = vld [vmem:[#allocation9 + $0xc] sm:$0xf]
    %v875 = vld [vmem:[#allocation9 + $0x10] sm:$0xf]
    %v876 = vld [vmem:[#allocation9 + $0x14] sm:$0xf]
    %v877 = vld [vmem:[#allocation9 + $0x18] sm:$0xf]
    %v878 = vld [vmem:[#allocation9 + $0x1c] sm:$0xf]
    %v879 = vld [vmem:[#allocation9 + $0x20] sm:$0xf]
    %v880 = vld [vmem:[#allocation9 + $0x24] sm:$0xf]
    %v881 = vld [vmem:[#allocation9 + $0x28] sm:$0xf]
    %v882 = vld [vmem:[#allocation9 + $0x2c] sm:$0xf]
    %v883 = vld [vmem:[#allocation9 + $0x30] sm:$0xf]
    %v884 = vld [vmem:[#allocation9 + $0x34] sm:$0xf]
    %v885 = vld [vmem:[#allocation9 + $0x38] sm:$0xf]
    %v886 = vld [vmem:[#allocation9 + $0x3c] sm:$0xf]
    %v887 = vld [vmem:[%s10] sm:$0x1]
    %v889 = vlaneseq
    %v890 = vshrl.u32 %v889, 7
    %v891 = vsub.s32 0, %v890
    %v892 = vrot.slane %v887, %v891
    %v910 = vunpack.c.l.b16 %v871
    %v911 = vunpack.c.l.b16 %v872
    %v912 = vunpack.c.l.b16 %v873
    %v913 = vunpack.c.l.b16 %v874
    %v914 = vunpack.c.l.b16 %v875
    %v915 = vunpack.c.l.b16 %v876
    %v916 = vunpack.c.l.b16 %v877
    %v917 = vunpack.c.l.b16 %v878
    %v918 = vunpack.c.l.b16 %v879
    %v919 = vunpack.c.l.b16 %v880
    %v920 = vunpack.c.l.b16 %v881
    %v921 = vunpack.c.l.b16 %v882
    %v922 = vunpack.c.l.b16 %v883
    %v923 = vunpack.c.l.b16 %v884
    %v924 = vunpack.c.l.b16 %v885
    %v925 = vunpack.c.l.b16 %v886
    %v926 = vpack.c.b16 %v911, %v910
    %v927 = vpack.c.b16 %v913, %v912
    %v928 = vpack.c.b16 %v915, %v914
    %v929 = vpack.c.b16 %v917, %v916
    %v930 = vpack.c.b16 %v919, %v918
    %v931 = vpack.c.b16 %v921, %v920
    %v932 = vpack.c.b16 %v923, %v922
    %v933 = vpack.c.b16 %v925, %v924
    %942 = vmatprep.subr.bf16.mxu0 0
    %943 = vmatpush1.bf16.msra.mxu0 %v926
    %944 = vmatprep.subr.bf16.mxu0 0
    %945 = vmatpush1.bf16.msra.mxu0 %v927
    %946 = vmatprep.subr.bf16.mxu0 0
    %947 = vmatpush1.bf16.msra.mxu0 %v928
    %948 = vmatprep.subr.bf16.mxu0 0
    %949 = vmatpush1.bf16.msra.mxu0 %v929
    %950 = vmatprep.subr.bf16.mxu0 0
    %951 = vmatpush1.bf16.msra.mxu0 %v930
    %952 = vmatprep.subr.bf16.mxu0 0
    %953 = vmatpush1.bf16.msra.mxu0 %v931
    %954 = vmatprep.subr.bf16.mxu0 0
    %955 = vmatpush1.bf16.msra.mxu0 %v932
    %956 = vmatprep.subr.bf16.mxu0 0
    %957 = vmatpush1.bf16.msra.mxu0 %v933
    %958 = vmatprep.subr.bf16.mxu0 0
    %959 = vmatpush1.bf16.msra.mxu0 0
    %960 = vmatprep.subr.bf16.mxu0 0
    %961 = vmatpush1.bf16.msra.mxu0 0
    %962 = vmatprep.subr.bf16.mxu0 0
    %963 = vmatpush1.bf16.msra.mxu0 0
    %964 = vmatprep.subr.bf16.mxu0 0
    %965 = vmatpush1.bf16.msra.mxu0 0
    %966 = vmatprep.subr.bf16.mxu0 0
    %967 = vmatpush1.bf16.msra.mxu0 0
    %968 = vmatprep.subr.bf16.mxu0 0
    %969 = vmatpush1.bf16.msra.mxu0 0
    %970 = vmatprep.subr.bf16.mxu0 0
    %971 = vmatpush1.bf16.msra.mxu0 0
    %972 = vmatprep.subr.bf16.mxu0 0
    %973 = vmatpush1.bf16.msra.mxu0 0
    %974 = vmatprep.mubr.bf16.mxu0 0
    %975 = vmatmul.mubr.bf16.gmra.mrb[0].mxu0 %v870
    %v976 = vpop.f32.mrb[0].mxu0
    %v977 = vadd.f32 %v892, %v976
    %v978 = vpop.f32.mrb[0].mxu0
    %v979 = vpop.f32.mrb[0].mxu0
    %v980 = vpop.f32.mrb[0].mxu0
    %981 = vdwg.mxu0
    %982 = vst [vmem:[%s11] sm:$0xff] %v977
    // Predicated region
    $region66: #{standalone_classifier_forward.1} parent=1 // pred_check
      _
    $region67: #{standalone_classifier_forward.1} parent=1 // pred_check_branch
      %984 = sbr.rel (0) target = $region69
    $region68: #{standalone_classifier_forward.1} parent=1 // pred_region
      _
    $region69: #{standalone_classifier_forward.1} parent=1 // pred_fallthru
      _
    // Predicated region
    $region70: #{standalone_classifier_forward.1} parent=1 // pred_check
      _
    $region71: #{standalone_classifier_forward.1} parent=1 // pred_check_branch
      %986 = sbr.rel (0) target = $region73
    $region72: #{standalone_classifier_forward.1} parent=1 // pred_region
      _
    $region73: #{standalone_classifier_forward.1} parent=1 // pred_fallthru
      _
    %987 = vsyncpa [#allocation3], 1
    %988 = vsyncpa [#allocation5], 1
    %989 = vsyncpa [#allocation8], 1

</llo_original>
